<compile_context>
chip_gen: v7x
topology: tpu7x:2x2x1
jax: 0.10.0
libtpu: 0.0.40
codegen_flags: <defaults>
</compile_context>

<pallas_src>
import functools

import jax
import jax.numpy as jnp
from jax.experimental import pallas as pl
from jax.experimental.pallas import tpu as pltpu


def _rmsnorm_kernel(x_ref, w_ref, o_ref, *, eps, input_dtype):
    # x_ref: (TM, H) tile of rows; w_ref: (1, H) merged f32 weight; o_ref: (TM, H).
    x = x_ref[...].astype(jnp.float32)
    var = jnp.mean(x * x, axis=-1, keepdims=True)            # (TM, 1)  XLU reduce
    inv = jax.lax.rsqrt(var + eps)                            # (TM, 1)  EUP
    # PyTorch ordering: merged_weight * hidden_states.to(input_dtype)
    normed = (x * inv).astype(input_dtype)
    o_ref[...] = (w_ref[...] * normed).astype(o_ref.dtype)


def _choose_row_tile(rows, hidden, in_dtype, out_dtype,
                     max_row_tile=1024, tile_budget_bytes=32 * 1024 * 1024):
    """Pick a large-but-VMEM-safe row tile (rows map to sublanes)."""
    in_b = jnp.dtype(in_dtype).itemsize
    out_b = jnp.dtype(out_dtype).itemsize
    # Per-row VMEM cost: double-buffered in + out tiles plus ~2 f32 intermediates.
    per_row = hidden * (2 * in_b + 2 * out_b + 2 * 4)
    rt = max(1, tile_budget_bytes // per_row)
    # Sublane packing: 8 rows/vreg for 32-bit, 16 for 16-bit, 32 for 8-bit dtypes.
    align = 32 // min(in_b, out_b)
    rt = max(align, (rt // align) * align)
    rt = min(rt, max_row_tile)
    rows_aligned = ((rows + align - 1) // align) * align
    return min(rt, rows_aligned)


def _constrain_masks(mask_values, constrain_mode):
    """Scalar-mask Constrainer (JAX glue; all modes are trivial scalar math)."""
    masks = [jnp.asarray(m, jnp.float32) for m in mask_values]
    if constrain_mode == "identity":
        return masks
    if constrain_mode == "01":
        return [jax.nn.sigmoid(m) for m in masks]
    if constrain_mode == "-11":
        return [jnp.tanh(m) for m in masks]
    if constrain_mode == "sum1":
        total = functools.reduce(lambda a, b: a + b, masks)
        return [m / total for m in masks]
    if constrain_mode == "cosine":
        return [0.5 - jnp.cos(jnp.pi * m) / 2 for m in masks]
    # TODO(synk): 'spherical' (SLERP) constraint needs the component-weight dot
    # statistics from the Constrainer; not wired here.
    raise NotImplementedError(constrain_mode)


def rmsnorms_with_masks_forward(hidden_states, norm_weights, mask_values,
                                variance_epsilon, constrain_mode="identity",
                                row_tile=None):
    """Pallas implementation of RMSNormsWithMasks.forward.

    hidden_states: (B, S, H) array.
    norm_weights:  list of (H,) arrays (one per RMSNorm).
    mask_values:   list of python floats / scalar arrays (scalar masks).
    """
    # --- glue: constrained masks + merged weight (tiny) ---
    constrained = _constrain_masks(mask_values, constrain_mode)
    masked = [m * jnp.asarray(w, jnp.float32)
              for m, w in zip(constrained, norm_weights)]
    merged_weight = functools.reduce(lambda a, b: a + b, masked)   # (H,), f32

    B, S, H = hidden_states.shape
    input_dtype = hidden_states.dtype
    # PyTorch: f32 merged_weight * x.to(input_dtype) -> promoted result dtype.
    out_dtype = jnp.result_type(merged_weight.dtype, input_dtype)

    rows = B * S
    x2d = hidden_states.reshape(rows, H)
    w2d = merged_weight.reshape(1, H)

    if row_tile is None:
        row_tile = _choose_row_tile(rows, H, input_dtype, out_dtype)

    # Pad rows so any B*S works with the perf-optimal tile; padded rows are zeros
    # (rsqrt(0 + eps) is finite) and are sliced off afterwards.
    padded_rows = pl.cdiv(rows, row_tile) * row_tile
    if padded_rows != rows:
        x2d = jnp.pad(x2d, ((0, padded_rows - rows), (0, 0)))

    out2d = pl.pallas_call(
        functools.partial(_rmsnorm_kernel, eps=float(variance_epsilon),
                          input_dtype=input_dtype),
        out_shape=jax.ShapeDtypeStruct((padded_rows, H), out_dtype),
        grid_spec=pltpu.PrefetchScalarGridSpec(
            num_scalar_prefetch=0,
            grid=(padded_rows // row_tile,),
            in_specs=[
                pl.BlockSpec((row_tile, H), lambda i: (i, 0)),
                # Constant (0, 0) block index: weight stays resident, not re-DMA'd.
                pl.BlockSpec((1, H), lambda i: (0, 0)),
            ],
            out_specs=pl.BlockSpec((row_tile, H), lambda i: (i, 0)),
        ),
        compiler_params=pltpu.CompilerParams(
            dimension_semantics=("parallel",),
            vmem_limit_bytes=48 * 1024 * 1024),
    )(x2d, w2d)

    if padded_rows != rows:
        out2d = out2d[:rows]
    return out2d.reshape(B, S, H)


def _reference_forward(hidden_states, norm_weights, mask_values, eps,
                       constrain_mode="identity"):
    constrained = _constrain_masks(mask_values, constrain_mode)
    merged = sum(m * jnp.asarray(w, jnp.float32)
                 for m, w in zip(constrained, norm_weights))
    input_dtype = hidden_states.dtype
    x = hidden_states.astype(jnp.float32)
    var = jnp.mean(x * x, axis=-1, keepdims=True)
    x = x * jax.lax.rsqrt(var + eps)
    return merged * x.astype(input_dtype)


if __name__ == "__main__":
    key = jax.random.PRNGKey(0)
    variance_epsilon = 1e-6

    # ---- case 1: f32, rows a multiple of the sublane packing ----
    B, S, H = 2, 8, 128
    k_x, k_w0, k_w1 = jax.random.split(key, 3)
    hidden_states = jax.random.normal(k_x, (B, S, H), dtype=jnp.float32)
    norm_w0 = 1.0 + 0.01 * jax.random.normal(k_w0, (H,), dtype=jnp.float32)
    norm_w1 = 1.0 + 0.01 * jax.random.normal(k_w1, (H,), dtype=jnp.float32)
    norm_weights = [norm_w0, norm_w1]
    mask_values = [0.6, 0.4]

    out = rmsnorms_with_masks_forward(hidden_states, norm_weights, mask_values,
                                      variance_epsilon)
    out = jax.block_until_ready(out)
    ref = _reference_forward(hidden_states, norm_weights, mask_values,
                             variance_epsilon)
    assert out.shape == hidden_states.shape
    assert out.dtype == ref.dtype
    assert jnp.allclose(out, ref, atol=1e-5, rtol=1e-5), "f32 mismatch vs reference"

    # ---- case 2: ragged row count (B*S not a multiple of 8) -> padded tail ----
    B2, S2 = 3, 5
    k_x2 = jax.random.split(k_x)[0]
    x_ragged = jax.random.normal(k_x2, (B2, S2, H), dtype=jnp.float32)
    out2 = jax.block_until_ready(
        rmsnorms_with_masks_forward(x_ragged, norm_weights, mask_values,
                                    variance_epsilon))
    ref2 = _reference_forward(x_ragged, norm_weights, mask_values,
                              variance_epsilon)
    assert jnp.allclose(out2, ref2, atol=1e-5, rtol=1e-5), "ragged mismatch"

    # ---- case 3: bf16 input (PyTorch cast ordering, f32-promoted output) ----
    x_bf16 = hidden_states.astype(jnp.bfloat16)
    out3 = jax.block_until_ready(
        rmsnorms_with_masks_forward(x_bf16, norm_weights, mask_values,
                                    variance_epsilon))
    ref3 = _reference_forward(x_bf16, norm_weights, mask_values,
                              variance_epsilon)
    assert out3.dtype == ref3.dtype
    assert jnp.allclose(out3.astype(jnp.float32), ref3.astype(jnp.float32),
                        atol=2e-2, rtol=2e-2), "bf16 mismatch vs reference"

    # ---- case 4: non-identity constrain mode ('sum1') exercised end to end ----
    out4 = jax.block_until_ready(
        rmsnorms_with_masks_forward(hidden_states, norm_weights, mask_values,
                                    variance_epsilon, constrain_mode="sum1"))
    ref4 = _reference_forward(hidden_states, norm_weights, mask_values,
                              variance_epsilon, constrain_mode="sum1")
    assert jnp.allclose(out4, ref4, atol=1e-5, rtol=1e-5), "sum1 mismatch"

    print("KERNEL_OK")
</pallas_src>

<mosaic_0001>
module attributes {stable_mosaic.version = 11 : i64} {
  func.func @_rmsnorm_kernel(%arg0: i32, %arg1: memref<16x128xf32, #tpu.memory_space<vmem>>, %arg2: memref<1x128xf32, #tpu.memory_space<vmem>>, %arg3: memref<16x128xf32, #tpu.memory_space<vmem>>) attributes {dimension_semantics = [#tpu.dimension_semantics<parallel>], iteration_bounds = array<i64: 1>, scalar_prefetch = 0 : i64, scratch_operands = 0 : i64, tpu.core_type = #tpu.core_type<tc>, window_params = [{transform_indices = @transform_0, window_bounds = array<i64: 16, 128>}, {pipeline_mode = #tpu.pipeline_mode<synchronous>, transform_indices = @transform_1, window_bounds = array<i64: 1, 128>}, {transform_indices = @transform_2, window_bounds = array<i64: 16, 128>}]} {
    %c0 = arith.constant 0 : index
    %c0_0 = arith.constant 0 : index
    %0 = vector.load %arg1[%c0, %c0_0] : memref<16x128xf32, #tpu.memory_space<vmem>>, vector<16x128xf32>
    %1 = arith.mulf %0, %0 : vector<16x128xf32>
    %cst = arith.constant dense<0.000000e+00> : vector<16xf32>
    %2 = vector.multi_reduction <add>, %1, %cst [1] : vector<16x128xf32> to vector<16xf32>
    %3 = vector.shape_cast %2 : vector<16xf32> to vector<16x1xf32>
    %cst_1 = arith.constant 1.280000e+02 : f32
    %4 = vector.broadcast %cst_1 : f32 to vector<16x1xf32>
    %5 = arith.divf %3, %4 : vector<16x1xf32>
    %cst_2 = arith.constant 9.99999997E-7 : f32
    %6 = vector.broadcast %cst_2 : f32 to vector<16x1xf32>
    %7 = arith.addf %5, %6 : vector<16x1xf32>
    %8 = math.rsqrt %7 : vector<16x1xf32>
    %9 = vector.broadcast %8 : vector<16x1xf32> to vector<16x128xf32>
    %10 = arith.mulf %0, %9 : vector<16x128xf32>
    %c0_3 = arith.constant 0 : index
    %c0_4 = arith.constant 0 : index
    %11 = vector.load %arg2[%c0_3, %c0_4] : memref<1x128xf32, #tpu.memory_space<vmem>>, vector<1x128xf32>
    %12 = vector.broadcast %11 : vector<1x128xf32> to vector<16x128xf32>
    %13 = arith.mulf %12, %10 : vector<16x128xf32>
    %c0_5 = arith.constant 0 : index
    %c0_6 = arith.constant 0 : index
    %14 = vector.load %arg3[%c0_5, %c0_6] : memref<16x128xf32, #tpu.memory_space<vmem>>, vector<16x128xf32>
    tpu.vector_store %arg3[%c0_5, %c0_6], %13 {strides = array<i32>} : memref<16x128xf32, #tpu.memory_space<vmem>>, vector<16x128xf32>,
    return
  }
  func.func @transform_0(%arg0: i32) -> (i32, i32) {
    %c0_i32 = arith.constant 0 : i32
    %c0_i32_0 = arith.constant 0 : i32
    return %arg0, %c0_i32 : i32, i32
  }
  func.func @transform_1(%arg0: i32) -> (i32, i32) {
    %c0_i32 = arith.constant 0 : i32
    %c0_i32_0 = arith.constant 0 : i32
    %c0_i32_1 = arith.constant 0 : i32
    return %c0_i32, %c0_i32_0 : i32, i32
  }
  func.func @transform_2(%arg0: i32) -> (i32, i32) {
    %c0_i32 = arith.constant 0 : i32
    %c0_i32_0 = arith.constant 0 : i32
    return %arg0, %c0_i32 : i32, i32
  }
}

</mosaic_0001>

<llo_original>
// kernel: tpu_custom_call.1
$region0: #{tpu_custom_call.1}
  #allocation0 [shape = 'u32[]', space=smem, size = 0x4, offset = 0x4, fixed_abs, tag = 'smem constant byte address 0x4 - core index']
  #allocation1 [shape = 'u32[144,128]{1,0:T(1,128)}', space=vmem, size = 0x12000, scoped, tag = 'internal scratch']
  %s0 = inlined_call_operand.hbm [shape: f32[16,128], index: 0, kind: input, shape index: {}]
  %s1 = inlined_call_operand.vmem [shape: f32[1,128], index: 1, kind: input, shape index: {}]
  %s2 = inlined_call_operand.hbm [shape: f32[16,128], index: 2, kind: output, shape index: {}]
  %s3 = sld [smem:[#allocation0]]
  $region22: #{tpu_custom_call.1} parent=0
    _
  %s5 = ssub.s32 1, %s3
  %s6 = scalar_select 0, %s5, %s3
  $region1: #{tpu_custom_call.1} parent=0
    #allocation2 [shape = 'u8[8192]{0}', space=vmem, size = 0x2000, scoped, tag = 'input window, operand 0, single buffered']
    #allocation3 [shape = 's32[1]{0}', space=sflag, size = 0x4, scoped, tag = 'scoped memory for tpu_custom_call.1']
    #allocation4 [shape = 's32[1]{0}', space=sflag, size = 0x4, scoped, tag = 'scoped memory for tpu_custom_call.1']
    #allocation5 [shape = 'u8[8192]{0}', space=vmem, size = 0x2000, scoped, tag = 'output window, operand 0, single buffered']
    %7 = vsyncpa [#allocation3], 0
    %8 = vsyncpa [#allocation4], 0
    // Predicated region
    $region2: #{tpu_custom_call.1} parent=1 // pred_check
      _
    $region3: #{tpu_custom_call.1} parent=1 // pred_check_branch
      %10 = sbr.rel (0) target = $region5
    $region4: #{tpu_custom_call.1} parent=1 // pred_region
      %s12 = ssub.s32 256, 256
      %13 = vsyncadd [#allocation3], %s12
      %s14 = sshll.u32 [#allocation2], 4
      %s15 = int_to_ptr.vmem [resolvable:$true] %s14
      %20 = dma.hbm_to_vmem [thread:$0]  %s0, 256, %s15, [#allocation3], 128, 128, 8
    $region5: #{tpu_custom_call.1} parent=1 // pred_fallthru
      _
    // Predicated region
    $region6: #{tpu_custom_call.1} parent=1 // pred_check
      _
    $region7: #{tpu_custom_call.1} parent=1 // pred_check_branch
      %22 = sbr.rel (0) target = $region9
    $region8: #{tpu_custom_call.1} parent=1 // pred_region
      _
    $region9: #{tpu_custom_call.1} parent=1 // pred_fallthru
      _
    // Predicated region
    $region10: #{tpu_custom_call.1} parent=1 // pred_check
      _
    $region11: #{tpu_custom_call.1} parent=1 // pred_check_branch
      %24 = sbr.rel (0) target = $region13
    $region12: #{tpu_custom_call.1} parent=1 // pred_region
      %25 = dma.done [#allocation3], 256
    $region13: #{tpu_custom_call.1} parent=1 // pred_fallthru
      _
    %v26 = vld [vmem:[#allocation2] sm:$0xff]
    %v27 = vld [vmem:[#allocation2 + $0x8] sm:$0xff]
    %v28 = vmul.f32 %v26, %v26
    %v29 = vmul.f32 %v27, %v27
    %30 = vadd.xlane.f32.xlu0 %v28
    %v31 = vpop.xlane.xlu0 %30
    %32 = vadd.xlane.f32.xlu0 %v29
    %v33 = vpop.xlane.xlu0 %32
    %v34 = vrcp.pop 128.0
    %v35 = vmul.f32 %v31, %v34
    %v36 = vmul.f32 %v33, %v34
    %v37 = vadd.f32 %v35, 1e-06
    %v38 = vadd.f32 %v36, 1e-06
    %v39 = vrsqrt.pop %v37
    %v40 = vrsqrt.pop %v38
    %v41 = vmul.f32 %v26, %v39
    %v42 = vmul.f32 %v27, %v40
    %v43 = vld [vmem:[%s1] sm:$0x1]
    %v45 = vlaneseq
    %v46 = vshrl.u32 %v45, 7
    %v47 = vsub.s32 0, %v46
    %v48 = vrot.slane %v43, %v47
    %v50 = vmul.f32 %v48, %v41
    %v51 = vmul.f32 %v48, %v42
    %52 = vst [vmem:[#allocation5] sm:$0xff] %v50
    %53 = vst [vmem:[#allocation5 + $0x8] sm:$0xff] %v51
    // Predicated region
    $region14: #{tpu_custom_call.1} parent=1 // pred_check
      _
    $region15: #{tpu_custom_call.1} parent=1 // pred_check_branch
      %55 = sbr.rel (0) target = $region17
    $region16: #{tpu_custom_call.1} parent=1 // pred_region
      %s57 = ssub.s32 256, 256
      %58 = vsyncadd [#allocation4], %s57
      %s59 = sshll.u32 [#allocation5], 4
      %s60 = int_to_ptr.vmem [resolvable:$true] %s59
      %65 = dma.vmem_to_hbm [thread:$0]  %s60, 256, %s2, [#allocation4], 128, 128, 8
    $region17: #{tpu_custom_call.1} parent=1 // pred_fallthru
      _
    // Predicated region
    $region18: #{tpu_custom_call.1} parent=1 // pred_check
      _
    $region19: #{tpu_custom_call.1} parent=1 // pred_check_branch
      %67 = sbr.rel (0) target = $region21
    $region20: #{tpu_custom_call.1} parent=1 // pred_region
      %68 = dma.done [#allocation4], 256
    $region21: #{tpu_custom_call.1} parent=1 // pred_fallthru
      _
    %69 = vsyncpa [#allocation3], 1
    %70 = vsyncpa [#allocation4], 1

</llo_original>
